<compile_context>
chip_gen: v5e
topology: v5e:2x2
jax: 0.10.0
libtpu: 0.0.40
codegen_flags: <defaults>
</compile_context>

<pallas_src>
import functools

import jax
import jax.numpy as jnp
from jax.experimental import pallas as pl
from jax.experimental.pallas import tpu as pltpu


def _round_up(x, m):
    return ((x + m - 1) // m) * m


def _vmem_limit_bytes():
    """Generation-aware scoped-VMEM limit: ~3/4 of physical, capped at 96 MiB.

    v5e/v6e (128 MiB physical) -> 96 MiB; v7x (64 MiB per TC) -> 48 MiB.
    Falls back to the most conservative value (48 MiB) if the query fails.
    """
    cap = 64 * 1024 * 1024
    try:
        cap = int(pltpu.get_tpu_info().vmem_capacity_bytes)
    except Exception:
        pass
    return max(32 * 1024 * 1024, min(96 * 1024 * 1024, (cap * 3) // 4))


def _choose_block_rows(B, lane_elems, itemsize, per_buffer_budget):
    """Pick Bb (batch rows per grid step).

    Uses the padded VMEM layout (lanes round up to 128), keeps Bb sublane-aligned
    for the dtype (8 rows f32 / 16 rows bf16 / 32 rows int8), and caps Bb so the
    grid has >= 2 steps whenever alignment allows (dual-TC on v7x, pipelining).
    """
    sub = 8 * max(1, 4 // max(1, itemsize))            # 8 (f32), 16 (bf16), 32 (i8)
    lane_bytes = _round_up(lane_elems, 128) * itemsize
    rows_budget = max(1, per_buffer_budget // lane_bytes)
    rows_split = _round_up(pl.cdiv(B, 2), sub)         # prefer >= 2 grid steps
    rows = min(rows_budget, rows_split)
    if rows >= B:
        return B                                       # full extent -> always legal
    rows = max(sub, (rows // sub) * sub)               # sublane-aligned
    return B if rows >= B else rows


def _pool_kernel(lens_ref, x_ref, o_ref, *, mode, seq_t, emb):
    """One grid step = one block of Bb batch rows.

    lens_ref: VMEM (Bb, 1) int32        -- valid length per row
    x_ref:    VMEM (Bb, T*E) native dt  -- lane-dense flattened sequence block
    o_ref:    VMEM (Bb, E) float32
    """
    lens = lens_ref[...]                               # (Bb, 1) int32
    x = x_ref[...]                                     # (Bb, T*E) native dtype

    if mode == 'max':
        acc = None
        for t in range(seq_t):
            sl = x[:, t * emb:(t + 1) * emb].astype(jnp.float32)   # (Bb, E) f32
            # Same arithmetic as PyTorch: hist = x - (1 - mask) * 1e9.
            cand = jnp.where(lens > t, sl, sl - 1e9)
            acc = cand if acc is None else jnp.maximum(acc, cand)
        o_ref[...] = acc
    else:
        acc = jnp.zeros((x.shape[0], emb), jnp.float32)             # (Bb, E) f32
        for t in range(seq_t):
            sl = x[:, t * emb:(t + 1) * emb].astype(jnp.float32)    # (Bb, E) f32
            acc = acc + jnp.where(lens > t, sl, 0.0)
        if mode == 'mean':
            acc = acc / (lens.astype(jnp.float32) + 1e-8)           # exact divide
        o_ref[...] = acc


def sequence_pooling(seq_value, seq_len, mode='mean', *, block_rows=None):
    """Pallas equivalent of SequencePoolingLayer(mode, supports_masking=False).

    seq_value: (B, T, E) float (kept in its native dtype for the DMA)
    seq_len:   (B, 1) int  (valid length of each sequence)
    returns:   (B, 1, E) float32
    """
    if mode not in ('sum', 'mean', 'max'):
        raise ValueError('parameter mode should in [sum, mean, max]')
    B, T, E = seq_value.shape
    TE = T * E
    lens = seq_len.reshape(B, 1).astype(jnp.int32)
    x_flat = seq_value.reshape(B, TE)                  # lane-dense, contiguous -> free

    itemsize = jnp.dtype(seq_value.dtype).itemsize
    vmem_limit = _vmem_limit_bytes()
    # 2 double-buffered input blocks + ~2 blocks of in-kernel temporaries
    # + output buffers / margin  ->  per-input-buffer budget = limit / 6.
    per_buffer_budget = vmem_limit // 6
    if block_rows is None:
        bb = _choose_block_rows(B, TE, itemsize, per_buffer_budget)
    else:
        bb = block_rows
    grid = (pl.cdiv(B, bb),)

    kernel = functools.partial(_pool_kernel, mode=mode, seq_t=T, emb=E)
    cost = pl.CostEstimate(
        flops=2 * B * TE,                               # mask + reduce, HBM-bound op
        transcendentals=0,
        bytes_accessed=B * TE * itemsize + B * E * 4 + B * 4,
    )

    out_flat = pl.pallas_call(
        kernel,
        out_shape=jax.ShapeDtypeStruct((B, E), jnp.float32),
        grid=grid,
        in_specs=[
            pl.BlockSpec((bb, 1), lambda i: (i, 0)),     # lengths (VMEM vector)
            pl.BlockSpec((bb, TE), lambda i: (i, 0)),    # lane-dense seq block
        ],
        out_specs=pl.BlockSpec((bb, E), lambda i: (i, 0)),
        compiler_params=pltpu.CompilerParams(
            dimension_semantics=("parallel",),           # shards across TCs on v7x
            vmem_limit_bytes=vmem_limit,
        ),
        cost_estimate=cost,
    )(lens, x_flat)

    # Free wrapper-side reshape to the module's (B, 1, E) contract.
    return out_flat[:, None, :]


def _reference(seq_value, seq_len, mode):
    """Pure-JAX reference mirroring the PyTorch forward (supports_masking=False)."""
    B, T, E = seq_value.shape
    lens = seq_len.reshape(B, 1).astype(jnp.float32)
    t_idx = jnp.arange(T, dtype=jnp.float32)[None, :]          # (1, T)
    mask = (t_idx < lens).astype(jnp.float32)[:, :, None]      # (B, T, 1)
    x = seq_value.astype(jnp.float32)
    if mode == 'max':
        hist = x - (1.0 - mask) * 1e9
        return jnp.max(hist, axis=1, keepdims=True)
    hist = jnp.sum(x * mask, axis=1)
    if mode == 'mean':
        hist = hist / (lens + 1e-8)
    return hist[:, None, :]


if __name__ == "__main__":
    key = jax.random.PRNGKey(0)
    k1, k2 = jax.random.split(key)

    B, T, E = 16, 8, 32
    x_f32 = jax.random.normal(k1, (B, T, E), dtype=jnp.float32)
    seq_len = jax.random.randint(k2, (B, 1), 1, T + 1).astype(jnp.int32)

    def check(seq_value, lens, mode, block_rows=None, tol=1e-5):
        out = sequence_pooling(seq_value, lens, mode=mode, block_rows=block_rows)
        out = jax.block_until_ready(out)
        ref = _reference(seq_value, lens, mode)
        if out.shape != ref.shape:
            return False
        return bool(jnp.allclose(out, ref, atol=tol, rtol=tol))

    ok = True

    # f32 input: bb=8 -> 2 grid steps ("parallel" axis exercises dual-TC path on v7x).
    for mode in ('sum', 'mean', 'max'):
        ok &= check(x_f32, seq_len, mode, tol=1e-5)

    # bf16 input: native narrow dtype on the DMA, f32 accumulation in the kernel.
    x_bf16 = x_f32.astype(jnp.bfloat16)
    for mode in ('sum', 'mean', 'max'):
        ok &= check(x_bf16, seq_len, mode, tol=2e-2)

    # Partial trailing block: B=10 with block_rows=8 exercises cdiv + padded block
    # (padded garbage rows are computed but their stores are clipped).
    xp, lp = x_f32[:10], seq_len[:10]
    for mode in ('sum', 'mean', 'max'):
        ok &= check(xp, lp, mode, block_rows=8, tol=1e-5)

    print("KERNEL_OK" if ok else "KERNEL_MISMATCH")
</pallas_src>

<mosaic_0001>
module attributes {stable_mosaic.version = 11 : i64} {
  func.func @_pool_kernel(%arg0: i32, %arg1: memref<8x1xi32, #tpu.memory_space<vmem>>, %arg2: memref<8x256xf32, #tpu.memory_space<vmem>>, %arg3: memref<8x32xf32, #tpu.memory_space<vmem>>) attributes {dimension_semantics = [#tpu.dimension_semantics<parallel>], iteration_bounds = array<i64: 2>, scalar_prefetch = 0 : i64, scratch_operands = 0 : i64, tpu.core_type = #tpu.core_type<tc>, window_params = [{transform_indices = @transform_0, window_bounds = array<i64: 8, 1>}, {transform_indices = @transform_1, window_bounds = array<i64: 8, 256>}, {transform_indices = @transform_2, window_bounds = array<i64: 8, 32>}]} {
    %c0 = arith.constant 0 : index
    %c0_0 = arith.constant 0 : index
    %0 = vector.load %arg1[%c0, %c0_0] : memref<8x1xi32, #tpu.memory_space<vmem>>, vector<8x1xi32>
    %c0_1 = arith.constant 0 : index
    %c0_2 = arith.constant 0 : index
    %1 = vector.load %arg2[%c0_1, %c0_2] : memref<8x256xf32, #tpu.memory_space<vmem>>, vector<8x256xf32>
    %cst = arith.constant 0.000000e+00 : f32
    %2 = vector.broadcast %cst : f32 to vector<8x32xf32>
    %3 = vector.extract_strided_slice %1 {offsets = [0, 0], sizes = [8, 32], strides = [1, 1]} : vector<8x256xf32> to vector<8x32xf32>
    %c0_i32 = arith.constant 0 : i32
    %4 = vector.broadcast %c0_i32 : i32 to vector<8x1xi32>
    %5 = arith.cmpi sgt, %0, %4 : vector<8x1xi32>
    %cst_3 = arith.constant 0.000000e+00 : f32
    %6 = vector.shape_cast %5 : vector<8x1xi1> to vector<8x1xi1>
    %7 = vector.broadcast %6 : vector<8x1xi1> to vector<8x32xi1>
    %8 = vector.broadcast %cst_3 : f32 to vector<8x32xf32>
    %9 = arith.select %7, %3, %8 : vector<8x32xi1>, vector<8x32xf32>
    %10 = arith.addf %2, %9 : vector<8x32xf32>
    %11 = vector.extract_strided_slice %1 {offsets = [0, 32], sizes = [8, 32], strides = [1, 1]} : vector<8x256xf32> to vector<8x32xf32>
    %c1_i32 = arith.constant 1 : i32
    %12 = vector.broadcast %c1_i32 : i32 to vector<8x1xi32>
    %13 = arith.cmpi sgt, %0, %12 : vector<8x1xi32>
    %cst_4 = arith.constant 0.000000e+00 : f32
    %14 = vector.shape_cast %13 : vector<8x1xi1> to vector<8x1xi1>
    %15 = vector.broadcast %14 : vector<8x1xi1> to vector<8x32xi1>
    %16 = vector.broadcast %cst_4 : f32 to vector<8x32xf32>
    %17 = arith.select %15, %11, %16 : vector<8x32xi1>, vector<8x32xf32>
    %18 = arith.addf %10, %17 : vector<8x32xf32>
    %19 = vector.extract_strided_slice %1 {offsets = [0, 64], sizes = [8, 32], strides = [1, 1]} : vector<8x256xf32> to vector<8x32xf32>
    %c2_i32 = arith.constant 2 : i32
    %20 = vector.broadcast %c2_i32 : i32 to vector<8x1xi32>
    %21 = arith.cmpi sgt, %0, %20 : vector<8x1xi32>
    %cst_5 = arith.constant 0.000000e+00 : f32
    %22 = vector.shape_cast %21 : vector<8x1xi1> to vector<8x1xi1>
    %23 = vector.broadcast %22 : vector<8x1xi1> to vector<8x32xi1>
    %24 = vector.broadcast %cst_5 : f32 to vector<8x32xf32>
    %25 = arith.select %23, %19, %24 : vector<8x32xi1>, vector<8x32xf32>
    %26 = arith.addf %18, %25 : vector<8x32xf32>
    %27 = vector.extract_strided_slice %1 {offsets = [0, 96], sizes = [8, 32], strides = [1, 1]} : vector<8x256xf32> to vector<8x32xf32>
    %c3_i32 = arith.constant 3 : i32
    %28 = vector.broadcast %c3_i32 : i32 to vector<8x1xi32>
    %29 = arith.cmpi sgt, %0, %28 : vector<8x1xi32>
    %cst_6 = arith.constant 0.000000e+00 : f32
    %30 = vector.shape_cast %29 : vector<8x1xi1> to vector<8x1xi1>
    %31 = vector.broadcast %30 : vector<8x1xi1> to vector<8x32xi1>
    %32 = vector.broadcast %cst_6 : f32 to vector<8x32xf32>
    %33 = arith.select %31, %27, %32 : vector<8x32xi1>, vector<8x32xf32>
    %34 = arith.addf %26, %33 : vector<8x32xf32>
    %35 = vector.extract_strided_slice %1 {offsets = [0, 128], sizes = [8, 32], strides = [1, 1]} : vector<8x256xf32> to vector<8x32xf32>
    %c4_i32 = arith.constant 4 : i32
    %36 = vector.broadcast %c4_i32 : i32 to vector<8x1xi32>
    %37 = arith.cmpi sgt, %0, %36 : vector<8x1xi32>
    %cst_7 = arith.constant 0.000000e+00 : f32
    %38 = vector.shape_cast %37 : vector<8x1xi1> to vector<8x1xi1>
    %39 = vector.broadcast %38 : vector<8x1xi1> to vector<8x32xi1>
    %40 = vector.broadcast %cst_7 : f32 to vector<8x32xf32>
    %41 = arith.select %39, %35, %40 : vector<8x32xi1>, vector<8x32xf32>
    %42 = arith.addf %34, %41 : vector<8x32xf32>
    %43 = vector.extract_strided_slice %1 {offsets = [0, 160], sizes = [8, 32], strides = [1, 1]} : vector<8x256xf32> to vector<8x32xf32>
    %c5_i32 = arith.constant 5 : i32
    %44 = vector.broadcast %c5_i32 : i32 to vector<8x1xi32>
    %45 = arith.cmpi sgt, %0, %44 : vector<8x1xi32>
    %cst_8 = arith.constant 0.000000e+00 : f32
    %46 = vector.shape_cast %45 : vector<8x1xi1> to vector<8x1xi1>
    %47 = vector.broadcast %46 : vector<8x1xi1> to vector<8x32xi1>
    %48 = vector.broadcast %cst_8 : f32 to vector<8x32xf32>
    %49 = arith.select %47, %43, %48 : vector<8x32xi1>, vector<8x32xf32>
    %50 = arith.addf %42, %49 : vector<8x32xf32>
    %51 = vector.extract_strided_slice %1 {offsets = [0, 192], sizes = [8, 32], strides = [1, 1]} : vector<8x256xf32> to vector<8x32xf32>
    %c6_i32 = arith.constant 6 : i32
    %52 = vector.broadcast %c6_i32 : i32 to vector<8x1xi32>
    %53 = arith.cmpi sgt, %0, %52 : vector<8x1xi32>
    %cst_9 = arith.constant 0.000000e+00 : f32
    %54 = vector.shape_cast %53 : vector<8x1xi1> to vector<8x1xi1>
    %55 = vector.broadcast %54 : vector<8x1xi1> to vector<8x32xi1>
    %56 = vector.broadcast %cst_9 : f32 to vector<8x32xf32>
    %57 = arith.select %55, %51, %56 : vector<8x32xi1>, vector<8x32xf32>
    %58 = arith.addf %50, %57 : vector<8x32xf32>
    %59 = vector.extract_strided_slice %1 {offsets = [0, 224], sizes = [8, 32], strides = [1, 1]} : vector<8x256xf32> to vector<8x32xf32>
    %c7_i32 = arith.constant 7 : i32
    %60 = vector.broadcast %c7_i32 : i32 to vector<8x1xi32>
    %61 = arith.cmpi sgt, %0, %60 : vector<8x1xi32>
    %cst_10 = arith.constant 0.000000e+00 : f32
    %62 = vector.shape_cast %61 : vector<8x1xi1> to vector<8x1xi1>
    %63 = vector.broadcast %62 : vector<8x1xi1> to vector<8x32xi1>
    %64 = vector.broadcast %cst_10 : f32 to vector<8x32xf32>
    %65 = arith.select %63, %59, %64 : vector<8x32xi1>, vector<8x32xf32>
    %66 = arith.addf %58, %65 : vector<8x32xf32>
    %c0_11 = arith.constant 0 : index
    %c0_12 = arith.constant 0 : index
    %67 = vector.load %arg3[%c0_11, %c0_12] : memref<8x32xf32, #tpu.memory_space<vmem>>, vector<8x32xf32>
    tpu.vector_store %arg3[%c0_11, %c0_12], %66 {strides = array<i32>} : memref<8x32xf32, #tpu.memory_space<vmem>>, vector<8x32xf32>,
    return
  }
  func.func @transform_0(%arg0: i32) -> (i32, i32) {
    %c0_i32 = arith.constant 0 : i32
    %c0_i32_0 = arith.constant 0 : i32
    return %arg0, %c0_i32 : i32, i32
  }
  func.func @transform_1(%arg0: i32) -> (i32, i32) {
    %c0_i32 = arith.constant 0 : i32
    %c0_i32_0 = arith.constant 0 : i32
    return %arg0, %c0_i32 : i32, i32
  }
  func.func @transform_2(%arg0: i32) -> (i32, i32) {
    %c0_i32 = arith.constant 0 : i32
    %c0_i32_0 = arith.constant 0 : i32
    return %arg0, %c0_i32 : i32, i32
  }
}

</mosaic_0001>

<llo_original>
// kernel: tpu_custom_call.1
$region0: #{tpu_custom_call.1}
  #allocation0 [shape = 'u32[]', space=smem, size = 0x4, offset = 0x4, fixed_abs, tag = 'smem constant byte address 0x4 - core index']
  #allocation1 [shape = 'u32[72,128]{1,0:T(1,128)}', space=vmem, size = 0x9000, scoped, tag = 'internal scratch']
  %s0 = inlined_call_operand.vmem [shape: s32[16,1], index: 0, kind: input, shape index: {}]
  %s1 = inlined_call_operand.hbm [shape: f32[16,256], index: 1, kind: input, shape index: {}]
  %s2 = inlined_call_operand.hbm [shape: f32[16,32], index: 2, kind: output, shape index: {}]
  %s3 = sld [smem:[#allocation0]]
  $region45: #{tpu_custom_call.1} parent=0
    _
  %s5 = ssub.s32 1, %s3
  %s6 = scalar_select 0, %s5, %s3
  $region1: #{tpu_custom_call.1} parent=0
    #allocation2 [shape = 'u8[16384]{0}', space=vmem, size = 0x4000, scoped, tag = 'input window, operand 1']
    #allocation3 [shape = 's32[2]{0}', space=sflag, size = 0x8, scoped, tag = 'scoped memory for tpu_custom_call.1']
    #allocation4 [shape = 's32[2]{0}', space=sflag, size = 0x8, scoped, tag = 'scoped memory for tpu_custom_call.1']
    #allocation5 [shape = 'u8[8192]{0}', space=vmem, size = 0x2000, scoped, tag = 'output window, operand 0']
    %7 = vsyncpa [#allocation3], 0
    %s8 = scalar_lea.sflag [#allocation3], 1
    %9 = vsyncpa %s8, 0
    %10 = vsyncpa [#allocation4], 0
    %s11 = scalar_lea.sflag [#allocation4], 1
    %12 = vsyncpa %s11, 0
    loop: start=0, step=1, limit=4
    $region2: #{tpu_custom_call.1} parent=1 // loop_pre_header
      _
    $region3: #{tpu_custom_call.1} parent=1 // loop_header
      %s14 = sphi 0, %s18
      %p15 = scmp.ge.s32.totalorder %s14, 4
      %s24 = sphi 0, %s26
      %s27 = sphi 0, %s24
      %s28 = sphi 0, %s27
      %s44 = sphi 0, %s28
      %s50 = sphi 0, %s52
      %s53 = sphi 0, %s50
      %s54 = sphi 0, %s53
      %s70 = sphi 0, %s54
      %s76 = sphi 0, %s78
      %s79 = sphi 0, %s76
      %s80 = sphi 0, %s79
      %s96 = sphi 0, %s80
    $region4: #{tpu_custom_call.1} parent=1 // loop_header_branch
      %17 = sbr.rel (%p15) target = $region8
    $region5: #{tpu_custom_call.1} parent=1 // loop_body
      %s19 = ssub.s32 %s14, 1
      %s20 = ssub.s32 %s14, 2
      %s21 = sadd.s32 %s14, 1
      %s22 = ssub.s32 %s14, %s21
      %p23 = scmp.eq.s32.totalorder %s22, 0
      %s25 = sadd.s32 %s24, 1
      %s26 = scalar_select %p23, %s24, %s25
      %p29 = pneg %p23
      %p30 = scmp.eq.s32.totalorder %s14, 1
      %p31 = por %p29, %p30
      %p32 = scmp.ne.s32.totalorder %s24, %s27
      %p33 = scmp.eq.s32.totalorder %s14, 0
      %p34 = por %p32, %p33
      %p35 = scmp.ne.s32.totalorder %s24, %s27
      %p36 = scmp.eq.s32.totalorder %s19, 1
      %p37 = por %p35, %p36
      %p38 = scmp.ne.s32.totalorder %s27, %s28
      %p39 = scmp.eq.s32.totalorder %s19, 0
      %p40 = por %p38, %p39
      %p41 = scmp.ne.s32.totalorder %s27, %s28
      %p42 = scmp.eq.s32.totalorder %s20, 1
      %p43 = por %p41, %p42
      %p45 = scmp.ne.s32.totalorder %s28, %s44
      %p46 = scmp.eq.s32.totalorder %s20, 0
      %p47 = por %p45, %p46
      %s48 = ssub.s32 %s14, %s21
      %p49 = scmp.eq.s32.totalorder %s48, 0
      %s51 = sadd.s32 %s50, 1
      %s52 = scalar_select %p49, %s50, %s51
      %p55 = pneg %p49
      %p56 = scmp.eq.s32.totalorder %s14, 1
      %p57 = por %p55, %p56
      %p58 = scmp.ne.s32.totalorder %s50, %s53
      %p59 = scmp.eq.s32.totalorder %s14, 0
      %p60 = por %p58, %p59
      %p61 = scmp.ne.s32.totalorder %s50, %s53
      %p62 = scmp.eq.s32.totalorder %s19, 1
      %p63 = por %p61, %p62
      %p64 = scmp.ne.s32.totalorder %s53, %s54
      %p65 = scmp.eq.s32.totalorder %s19, 0
      %p66 = por %p64, %p65
      %p67 = scmp.ne.s32.totalorder %s53, %s54
      %p68 = scmp.eq.s32.totalorder %s20, 1
      %p69 = por %p67, %p68
      %p71 = scmp.ne.s32.totalorder %s54, %s70
      %p72 = scmp.eq.s32.totalorder %s20, 0
      %p73 = por %p71, %p72
      %s74 = ssub.s32 %s14, %s21
      %p75 = scmp.eq.s32.totalorder %s74, 0
      %s77 = sadd.s32 %s76, 1
      %s78 = scalar_select %p75, %s76, %s77
      %p81 = pneg %p75
      %p82 = scmp.eq.s32.totalorder %s14, 1
      %p83 = por %p81, %p82
      %p84 = scmp.ne.s32.totalorder %s76, %s79
      %p85 = scmp.eq.s32.totalorder %s14, 0
      %p86 = por %p84, %p85
      %p87 = scmp.ne.s32.totalorder %s76, %s79
      %p88 = scmp.eq.s32.totalorder %s19, 1
      %p89 = por %p87, %p88
      %p90 = scmp.ne.s32.totalorder %s79, %s80
      %p91 = scmp.eq.s32.totalorder %s19, 0
      %p92 = por %p90, %p91
      %p93 = scmp.ne.s32.totalorder %s79, %s80
      %p94 = scmp.eq.s32.totalorder %s20, 1
      %p95 = por %p93, %p94
      %p97 = scmp.ne.s32.totalorder %s80, %s96
      %p98 = scmp.eq.s32.totalorder %s20, 0
      %p99 = por %p97, %p98
      %p100 = scmp.le.s32.totalorder 1, %s14
      %p101 = scmp.lt.s32.totalorder %s14, 3
      %p102 = pnand %p100, %p101
      %p103 = pneg %p102
      // Predicated region
      $region9: #{tpu_custom_call.1} parent=5 // pred_check
        _
      $region10: #{tpu_custom_call.1} parent=5 // pred_check_branch
        %105 = sbr.rel (%p102) target = $region12
      $region11: #{tpu_custom_call.1} parent=5 // pred_region
        %s106 = ssub.s32 %s14, 1
      $region12: #{tpu_custom_call.1} parent=5 // pred_fallthru
        _
      %p107 = scmp.lt.s32.totalorder %s14, 2
      // Predicated region
      $region13: #{tpu_custom_call.1} parent=5 // pred_check
        %p108 = pneg %p107
      $region14: #{tpu_custom_call.1} parent=5 // pred_check_branch
        %110 = sbr.rel (%p108) target = $region16
      $region15: #{tpu_custom_call.1} parent=5 // pred_region
        // Predicated region
        $region17: #{tpu_custom_call.1} parent=15 // pred_check
          %p111 = pneg %p34
        $region18: #{tpu_custom_call.1} parent=15 // pred_check_branch
          %113 = sbr.rel (%p111) target = $region20
        $region19: #{tpu_custom_call.1} parent=15 // pred_region
          %p114 = scmp.lt.s32.totalorder %s14, 1
          %s115 = scalar_select %p114, %s14, 1
          %s116 = smul.addr %s115, 8
          %s117 = scalar_lea.vmem %s0, %s116
        $region20: #{tpu_custom_call.1} parent=15 // pred_fallthru
          _
        // Predicated region
        $region21: #{tpu_custom_call.1} parent=15 // pred_check
          %p118 = pneg %p60
        $region22: #{tpu_custom_call.1} parent=15 // pred_check_branch
          %120 = sbr.rel (%p118) target = $region24
        $region23: #{tpu_custom_call.1} parent=15 // pred_region
          %s121 = sand.u32 %s50, 1
          %s122 = scalar_lea.sflag [#allocation3], %s121
          %s123 = sand.u32 %s50, 1
          %s124 = smul.addr %s123, 16
          %s125 = scalar_lea.vmem [#allocation2], %s124
          %127 = vsyncadd %s122, 0
          %s128 = smul.addr %s14, 2
          %s129 = smul.addr %s128, 8
          %s130 = scalar_lea.hbm %s1, %s129
          %s132 = sshll.u32 %s130, 4
          %s133 = int_to_ptr.hbm [resolvable:$true] %s132
          %s134 = sshll.u32 %s125, 4
          %s135 = int_to_ptr.vmem [resolvable:$true] %s134
          %137 = dma.hbm_to_vmem [thread:$0]  %s133, 256, %s135, %s122
        $region24: #{tpu_custom_call.1} parent=15 // pred_fallthru
          _
      $region16: #{tpu_custom_call.1} parent=5 // pred_fallthru
        _
      %p138 = scmp.le.s32.totalorder 1, %s14
      %p139 = scmp.lt.s32.totalorder %s14, 3
      %p140 = pnand %p138, %p139
      %p141 = pneg %p140
      // Predicated region
      $region25: #{tpu_custom_call.1} parent=5 // pred_check
        _
      $region26: #{tpu_custom_call.1} parent=5 // pred_check_branch
        %143 = sbr.rel (%p140) target = $region28
      $region27: #{tpu_custom_call.1} parent=5 // pred_region
        %s144 = ssub.s32 %s14, 1
        %s145 = sand.u32 %s53, 1
        %s146 = scalar_lea.sflag [#allocation3], %s145
        %s147 = sand.u32 %s53, 1
        %s148 = smul.addr %s147, 16
        %s149 = scalar_lea.vmem [#allocation2], %s148
        // Predicated region
        $region29: #{tpu_custom_call.1} parent=27 // pred_check
          %p150 = pneg %p66
        $region30: #{tpu_custom_call.1} parent=27 // pred_check_branch
          %152 = sbr.rel (%p150) target = $region32
        $region31: #{tpu_custom_call.1} parent=27 // pred_region
          %154 = dma.done %s146, 256
        $region32: #{tpu_custom_call.1} parent=27 // pred_fallthru
          _
        %p155 = scmp.lt.s32.totalorder %s19, 1
        %s156 = scalar_select %p155, %s19, 1
        %s157 = smul.addr %s156, 8
        %s158 = scalar_lea.vmem %s0, %s157
        %p159 = pneg %p40
        %p160 = pneg %p37
        %s161 = sand.u32 %s53, 1
        %s162 = scalar_lea.sflag [#allocation3], %s161
        %s163 = sand.u32 %s53, 1
        %s164 = smul.addr %s163, 16
        %s165 = scalar_lea.vmem [#allocation2], %s164
        %p166 = pneg %p66
        %p167 = pneg %p63
        %p168 = pneg %p92
        %p169 = pneg %p89
        %s170 = sand.u32 %s79, 1
        %s171 = scalar_lea.sflag [#allocation4], %s170
        %s172 = sand.u32 %s79, 1
        %s173 = smul.addr %s172, 8
        %s174 = scalar_lea.vmem [#allocation5], %s173
        %p175 = scmp.lt.s32.totalorder %s19, 1
        %s176 = scalar_select %p175, %s19, 1
        %s177 = smul.addr %s176, 8
        %s178 = scalar_lea.vmem %s0, %s177
        %v179 = vld [vmem:[%s178] sm:$0xff]
        %v180 = vld [vmem:[%s149] sm:$0xff]
        %v181 = vld [vmem:[%s149 + $0x8] sm:$0xff]
        %vm182 = vcmp.gt.s32.totalorder %v179, 0
        %v183 = vsel %vm182, 1, 0
        %184 = vset.pattern.permute.xlu0 0
        %185 = vperm.xlu0 %184, %v183
        %v186 = vpop.permute.xlu0 %185
        %vm187 = vcmp.eq.s32.totalorder %v186, 1
        %v188 = vsel %vm187, %v180, 0.0
        %v189 = vadd.f32 %v188, 0.0
        %vm190 = vcmp.gt.s32.totalorder %v179, 1
        %v191 = vsel %vm190, 1, 0
        %192 = vset.pattern.permute.xlu0 0
        %193 = vperm.xlu0 %192, %v191
        %v194 = vpop.permute.xlu0 %193
        %vm195 = vcmp.eq.s32.totalorder %v194, 1
        %v196 = vsel %vm195, %v180, 0.0
        %198 = vrot.lane.b32.xlu0 %v196, 96
        %v199 = vpop.permute.xlu0 %198
        %v201 = vadd.f32 %v189, %v199
        %vm202 = vcmp.gt.s32.totalorder %v179, 2
        %v203 = vsel %vm202, 1, 0
        %204 = vset.pattern.permute.xlu0 0
        %205 = vperm.xlu0 %204, %v203
        %v206 = vpop.permute.xlu0 %205
        %vm207 = vcmp.eq.s32.totalorder %v206, 1
        %v208 = vsel %vm207, %v180, 0.0
        %210 = vrot.lane.b32.xlu0 %v208, 64
        %v211 = vpop.permute.xlu0 %210
        %v213 = vadd.f32 %v201, %v211
        %vm214 = vcmp.gt.s32.totalorder %v179, 3
        %v215 = vsel %vm214, 1, 0
        %216 = vset.pattern.permute.xlu0 0
        %217 = vperm.xlu0 %216, %v215
        %v218 = vpop.permute.xlu0 %217
        %vm219 = vcmp.eq.s32.totalorder %v218, 1
        %v220 = vsel %vm219, %v180, 0.0
        %222 = vrot.lane.b32.xlu0 %v220, 32
        %v223 = vpop.permute.xlu0 %222
        %v225 = vadd.f32 %v213, %v223
        %vm226 = vcmp.gt.s32.totalorder %v179, 4
        %v227 = vsel %vm226, 1, 0
        %228 = vset.pattern.permute.xlu0 0
        %229 = vperm.xlu0 %228, %v227
        %v230 = vpop.permute.xlu0 %229
        %vm231 = vcmp.eq.s32.totalorder %v230, 1
        %v232 = vsel %vm231, %v181, 0.0
        %v233 = vadd.f32 %v225, %v232
        %vm234 = vcmp.gt.s32.totalorder %v179, 5
        %v235 = vsel %vm234, 1, 0
        %236 = vset.pattern.permute.xlu0 0
        %237 = vperm.xlu0 %236, %v235
        %v238 = vpop.permute.xlu0 %237
        %vm239 = vcmp.eq.s32.totalorder %v238, 1
        %v240 = vsel %vm239, %v181, 0.0
        %242 = vrot.lane.b32.xlu0 %v240, 96
        %v243 = vpop.permute.xlu0 %242
        %v245 = vadd.f32 %v233, %v243
        %vm246 = vcmp.gt.s32.totalorder %v179, 6
        %v247 = vsel %vm246, 1, 0
        %248 = vset.pattern.permute.xlu0 0
        %249 = vperm.xlu0 %248, %v247
        %v250 = vpop.permute.xlu0 %249
        %vm251 = vcmp.eq.s32.totalorder %v250, 1
        %v252 = vsel %vm251, %v181, 0.0
        %254 = vrot.lane.b32.xlu0 %v252, 64
        %v255 = vpop.permute.xlu0 %254
        %v257 = vadd.f32 %v245, %v255
        %vm258 = vcmp.gt.s32.totalorder %v179, 7
        %v259 = vsel %vm258, 1, 0
        %260 = vset.pattern.permute.xlu0 0
        %261 = vperm.xlu0 %260, %v259
        %v262 = vpop.permute.xlu0 %261
        %vm263 = vcmp.eq.s32.totalorder %v262, 1
        %v264 = vsel %vm263, %v181, 0.0
        %266 = vrot.lane.b32.xlu0 %v264, 32
        %v267 = vpop.permute.xlu0 %266
        %v269 = vadd.f32 %v257, %v267
        %vm270 = vcmask 261120
        %271 = vst.msk [vmem:[%s174] sm:$0xff] %vm270, %v269
        %s272 = sand.u32 %s79, 1
        %s273 = scalar_lea.sflag [#allocation4], %s272
        %s274 = sand.u32 %s79, 1
        %s275 = smul.addr %s274, 8
        %s276 = scalar_lea.vmem [#allocation5], %s275
        // Predicated region
        $region33: #{tpu_custom_call.1} parent=27 // pred_check
          %p277 = pneg %p89
        $region34: #{tpu_custom_call.1} parent=27 // pred_check_branch
          %279 = sbr.rel (%p277) target = $region36
        $region35: #{tpu_custom_call.1} parent=27 // pred_region
          %281 = vsyncadd %s273, 0
          %s282 = smul.addr %s19, 8
          %s283 = scalar_lea.hbm %s2, %s282
          %s285 = sshll.u32 %s276, 4
          %s286 = int_to_ptr.vmem [resolvable:$true] %s285
          %s287 = sshll.u32 %s283, 4
          %s288 = int_to_ptr.hbm [resolvable:$true] %s287
          %290 = dma.vmem_to_hbm [thread:$0]  %s286, 128, %s288, %s273
        $region36: #{tpu_custom_call.1} parent=27 // pred_fallthru
          _
      $region28: #{tpu_custom_call.1} parent=5 // pred_fallthru
        _
      %p291 = scmp.le.s32.totalorder 2, %s14
      // Predicated region
      $region37: #{tpu_custom_call.1} parent=5 // pred_check
        %p292 = pneg %p291
      $region38: #{tpu_custom_call.1} parent=5 // pred_check_branch
        %294 = sbr.rel (%p292) target = $region40
      $region39: #{tpu_custom_call.1} parent=5 // pred_region
        %s295 = ssub.s32 %s14, 2
        // Predicated region
        $region41: #{tpu_custom_call.1} parent=39 // pred_check
          %p296 = pneg %p95
        $region42: #{tpu_custom_call.1} parent=39 // pred_check_branch
          %298 = sbr.rel (%p296) target = $region44
        $region43: #{tpu_custom_call.1} parent=39 // pred_region
          %s299 = sand.u32 %s80, 1
          %s300 = scalar_lea.sflag [#allocation4], %s299
          %s301 = sand.u32 %s80, 1
          %s302 = smul.addr %s301, 8
          %s303 = scalar_lea.vmem [#allocation5], %s302
          %305 = dma.done %s300, 128
        $region44: #{tpu_custom_call.1} parent=39 // pred_fallthru
          _
      $region40: #{tpu_custom_call.1} parent=5 // pred_fallthru
        _
    $region6: #{tpu_custom_call.1} parent=1 // loop_footer
      %s18 = sadd.s32 1, %s14
    $region7: #{tpu_custom_call.1} parent=1 // loop_footer_branch
      %13 = sbr.rel target = $region3
    $region8: #{tpu_custom_call.1} parent=1 // loop_exit
      _
    %306 = vsyncpa [#allocation3], 1
    %s307 = scalar_lea.sflag [#allocation3], 1
    %308 = vsyncpa %s307, 1
    %309 = vsyncpa [#allocation4], 1
    %s310 = scalar_lea.sflag [#allocation4], 1
    %311 = vsyncpa %s310, 1

</llo_original>
